<compile_context>
chip_gen: v5e
topology: v5e:2x2
jax: 0.10.0
libtpu: 0.0.40
codegen_flags: <defaults>
</compile_context>

<pallas_src>
import functools

import jax
import jax.numpy as jnp
from jax import lax
from jax.experimental import pallas as pl
from jax.experimental.pallas import tpu as pltpu


def _fold_bn(w, gamma, beta, mean, var, eps):
    """Fold inference BatchNorm into the conv weights (tap-major reshape)."""
    c_out = w.shape[0]
    scale = gamma * lax.rsqrt(var + eps)                     # (C_out,)
    shift = (beta - mean * scale)[:, None]                   # (C_out, 1)
    # column index = (di*3 + dj) * C_in + ch  (tap-major, matches the patches)
    w_mat = jnp.transpose(w, (0, 2, 3, 1)).reshape(c_out, -1) * scale[:, None]
    return w_mat, shift


def _build_stem_patches(x, H2, W2):
    """Parity-plane im2col for conv1 (k3 s2 p1).

    Layer-1 output pixels are grouped by (row parity, col parity) and laid out
    on a zero-bordered (H2+1, W2+1) "plane" grid (+1 trailing zero element), so
    that inside the kernel conv2's stride-2 3x3 taps are plain contiguous
    slices of conv1's output.  Pure layout plumbing on the small raw input.

    Returns:
      patches: (N, 9*C0, 4*L) f32, L = (H2+1)*(W2+1)+1
      mask:    (1, 4*L)       f32, 1 at real conv1 pixels, 0 at plane borders
    """
    n, c0, _, _ = x.shape
    xp = jnp.pad(x, ((0, 0), (0, 0), (1, 1), (1, 1)))
    hp1, wp1 = H2 + 1, W2 + 1
    chunks, masks = [], []
    # class order q=0..3 must match the kernel's tap->plane map:
    #   q=0: y1(odd row, odd col)  -> plane EE
    #   q=1: y1(odd,     even)     -> plane EO
    #   q=2: y1(even,    odd)      -> plane OE
    #   q=3: y1(even,    even)     -> plane OO
    for a, b in ((1, 1), (1, 0), (0, 1), (0, 0)):
        taps = []
        for di in range(3):
            for dj in range(3):
                r0, c_ = 2 * a + di, 2 * b + dj
                taps.append(lax.slice(
                    xp, (0, 0, r0, c_),
                    (n, c0, r0 + 4 * (H2 - 1) + 1, c_ + 4 * (W2 - 1) + 1),
                    (1, 1, 4, 4)))                          # (N, C0, H2, W2)
        t = jnp.stack(taps, axis=1)                          # (N, 9, C0, H2, W2)
        # place the valid rectangle at plane offset (a, b); borders are zero
        t = jnp.pad(t, ((0, 0), (0, 0), (0, 0), (a, 1 - a), (b, 1 - b)))
        t = t.reshape(n, 9 * c0, hp1 * wp1)
        chunks.append(jnp.pad(t, ((0, 0), (0, 0), (0, 1))))  # (N, 27, L)
        m = jnp.zeros((hp1, wp1), jnp.float32).at[a:a + H2, b:b + W2].set(1.0)
        masks.append(jnp.pad(m.reshape(-1), (0, 1)))
    patches = jnp.concatenate(chunks, axis=2)                # (N, 9*C0, 4*L)
    mask = jnp.concatenate(masks, axis=0)[None, :]           # (1, 4*L)
    return patches, mask


def _stem_kernel(p1_ref, mask_ref, w1_ref, s1_ref, w2_ref, s2_ref, o_ref,
                 y1_scr, *, W2, L):
    """Fused Stem for one batch sample.

    p1_ref:  (9*C0, 4*L)      parity-grouped conv1 patches
    mask_ref:(1, 4*L)         1 at real conv1 pixels, 0 at plane borders
    w1_ref:  (C_mid, 9*C0)    conv1 weights, BN scale folded in
    s1_ref:  (C_mid, 1)       conv1 folded BN shift
    w2_ref:  (C_out, 9*C_mid) conv2 weights, BN scale folded in (tap-major)
    s2_ref:  (C_out, 1)       conv2 folded BN shift
    o_ref:   (C_out, H2*(W2+1))
    y1_scr:  VMEM (C_mid, 4*L) -- conv1 output as 4 resident parity planes
    """
    wp1 = W2 + 1
    m2 = (o_ref.shape[-1])                       # = H2 * (W2 + 1)

    # ---- layer 1: conv1 + BN as one wide matmul; ReLU + border mask on VPU --
    y1 = jnp.dot(w1_ref[...], p1_ref[...], preferred_element_type=jnp.float32)
    y1 = jnp.maximum(y1 + s1_ref[...], 0.0) * mask_ref[...]
    y1_scr[...] = y1.astype(y1_scr.dtype)        # parity planes stay in VMEM

    # ---- layer 2: the 9 stride-2 taps are contiguous slices of the planes ---
    # tap (di,dj) in row-major order -> (plane q, flat offset a*(W2+1)+b)
    tap_src = ((0, 0), (1, 0), (0, 1),
               (2, 0), (3, 0), (2, 1),
               (0, wp1), (1, wp1), (0, wp1 + 1))
    rhs = jnp.concatenate(
        [y1_scr[:, q * L + off:q * L + off + m2] for q, off in tap_src],
        axis=0)                                   # (9*C_mid, H2*(W2+1))
    y2 = jnp.dot(w2_ref[...], rhs, preferred_element_type=jnp.float32)
    o_ref[...] = (y2 + s2_ref[...]).astype(o_ref.dtype)


def stem_forward(x, p, *, eps=1e-5, stream_dtype=jnp.float32):
    """Stem forward: ConvLayer2D(k3 s2 p1)+BN+ReLU -> ConvLayer2D(k3 s2 p1)+BN.

    x: (N, C_in, H, W) float32, H % 4 == 0, W % 4 == 0.
    Set stream_dtype=jnp.bfloat16 to halve streamed patch/weight bytes on
    v5e/v6e (accumulation stays f32; tolerances must be loosened).
    """
    n, c0, h, w = x.shape
    assert h % 4 == 0 and w % 4 == 0, "Stem kernel requires H, W divisible by 4"
    c_mid = p["w1"].shape[0]
    c_out = p["w2"].shape[0]
    h2, w2 = h // 4, w // 4
    wp1 = w2 + 1
    l = (h2 + 1) * wp1 + 1                       # per-parity-plane flat length
    m2 = h2 * wp1                                # output lanes incl. junk col

    patches, mask = _build_stem_patches(x, h2, w2)
    w1m, s1 = _fold_bn(p["w1"], p["g1"], p["b1"], p["m1"], p["v1"], eps)
    w2m, s2 = _fold_bn(p["w2"], p["g2"], p["b2"], p["m2"], p["v2"], eps)
    patches = patches.astype(stream_dtype)
    w1m = w1m.astype(stream_dtype)
    w2m = w2m.astype(stream_dtype)

    kernel = functools.partial(_stem_kernel, W2=w2, L=l)
    out = pl.pallas_call(
        kernel,
        out_shape=jax.ShapeDtypeStruct((n, c_out, m2), jnp.float32),
        grid_spec=pltpu.PrefetchScalarGridSpec(
            num_scalar_prefetch=0,
            grid=(n,),
            in_specs=[
                pl.BlockSpec((None, 9 * c0, 4 * l), lambda i: (i, 0, 0)),
                pl.BlockSpec((1, 4 * l), lambda i: (0, 0)),
                pl.BlockSpec((c_mid, 9 * c0), lambda i: (0, 0)),
                pl.BlockSpec((c_mid, 1), lambda i: (0, 0)),
                pl.BlockSpec((c_out, 9 * c_mid), lambda i: (0, 0)),
                pl.BlockSpec((c_out, 1), lambda i: (0, 0)),
            ],
            out_specs=pl.BlockSpec((None, c_out, m2), lambda i: (i, 0, 0)),
            scratch_shapes=[pltpu.VMEM((c_mid, 4 * l), stream_dtype)],
        ),
        compiler_params=pltpu.CompilerParams(
            dimension_semantics=("parallel",),          # v7x: shard N over TCs
            vmem_limit_bytes=32 * 1024 * 1024),         # sized for v7x scoped
    )(patches, mask, w1m, s1, w2m, s2)

    # Free reshape + strip the per-row junk column (width W2+1 -> W2); output
    # is already channel-major per sample, i.e. NCHW -- no transpose needed.
    return out.reshape(n, c_out, h2, wp1)[..., :w2]


def _reference_stem(x, p, eps=1e-5):
    """Pure-JAX reference: Conv2d(s2,p1,no bias) + inference BN (+ReLU layer1)."""
    def layer(x, w, g, b, mean, var, relu):
        y = lax.conv_general_dilated(
            x, w, window_strides=(2, 2), padding=[(1, 1), (1, 1)],
            dimension_numbers=("NCHW", "OIHW", "NCHW"),
            precision=lax.Precision.HIGHEST)
        inv_std = lax.rsqrt(var + eps)
        y = (y - mean[None, :, None, None]) * (g * inv_std)[None, :, None, None] \
            + b[None, :, None, None]
        return jnp.maximum(y, 0.0) if relu else y

    y = layer(x, p["w1"], p["g1"], p["b1"], p["m1"], p["v1"], True)
    return layer(y, p["w2"], p["g2"], p["b2"], p["m2"], p["v2"], False)


if __name__ == "__main__":
    key = jax.random.PRNGKey(0)
    ks = jax.random.split(key, 8)

    # Stem defaults: in_dim=3, dim=96 ->
    #   ConvLayer2D(3, 24, k3 s2 p1)+BN+ReLU ; ConvLayer2D(24, 96, k3 s2 p1)+BN.
    N, IN_DIM, DIM, H, W = 2, 3, 96, 16, 16
    MID = DIM // 4

    x = jax.random.normal(ks[0], (N, IN_DIM, H, W), dtype=jnp.float32)
    params = {
        # PyTorch Conv2d weight layout (C_out, C_in, K, K), bias=False.
        "w1": jax.random.normal(ks[1], (MID, IN_DIM, 3, 3), jnp.float32) * 0.2,
        "w2": jax.random.normal(ks[2], (DIM, MID, 3, 3), jnp.float32) * 0.1,
        # BatchNorm2d: weight = bn_weight_init(=1), bias = 0 per __init__;
        # running stats set to non-trivial values to exercise inference BN.
        "g1": jnp.ones((MID,), jnp.float32),
        "b1": jnp.zeros((MID,), jnp.float32),
        "m1": jax.random.normal(ks[3], (MID,), jnp.float32) * 0.1,
        "v1": jnp.abs(jax.random.normal(ks[4], (MID,), jnp.float32)) * 0.5 + 0.5,
        "g2": jnp.ones((DIM,), jnp.float32),
        "b2": jnp.zeros((DIM,), jnp.float32),
        "m2": jax.random.normal(ks[5], (DIM,), jnp.float32) * 0.1,
        "v2": jnp.abs(jax.random.normal(ks[6], (DIM,), jnp.float32)) * 0.5 + 0.5,
    }

    out = jax.block_until_ready(stem_forward(x, params))
    ref = _reference_stem(x, params)

    assert out.shape == (N, DIM, H // 4, W // 4), out.shape
    max_err = float(jnp.max(jnp.abs(out - ref)))
    assert jnp.allclose(out, ref, atol=1e-3, rtol=1e-3), f"mismatch: {max_err}"

    print("KERNEL_OK")
</pallas_src>

<mosaic_0001>
module attributes {stable_mosaic.version = 11 : i64} {
  func.func @_stem_kernel(%arg0: i32, %arg1: memref<1x27x104xf32, #tpu.memory_space<vmem>>, %arg2: memref<1x104xf32, #tpu.memory_space<vmem>>, %arg3: memref<24x27xf32, #tpu.memory_space<vmem>>, %arg4: memref<24x1xf32, #tpu.memory_space<vmem>>, %arg5: memref<96x216xf32, #tpu.memory_space<vmem>>, %arg6: memref<96x1xf32, #tpu.memory_space<vmem>>, %arg7: memref<1x96x20xf32, #tpu.memory_space<vmem>>, %arg8: memref<24x104xf32, #tpu.memory_space<vmem>>) attributes {dimension_semantics = [#tpu.dimension_semantics<parallel>], iteration_bounds = array<i64: 2>, scalar_prefetch = 0 : i64, scratch_operands = 1 : i64, tpu.core_type = #tpu.core_type<tc>, window_params = [{transform_indices = @transform_0, window_bounds = array<i64: 1, 27, 104>}, {pipeline_mode = #tpu.pipeline_mode<synchronous>, transform_indices = @transform_1, window_bounds = array<i64: 1, 104>}, {pipeline_mode = #tpu.pipeline_mode<synchronous>, transform_indices = @transform_2, window_bounds = array<i64: 24, 27>}, {pipeline_mode = #tpu.pipeline_mode<synchronous>, transform_indices = @transform_3, window_bounds = array<i64: 24, 1>}, {pipeline_mode = #tpu.pipeline_mode<synchronous>, transform_indices = @transform_4, window_bounds = array<i64: 96, 216>}, {pipeline_mode = #tpu.pipeline_mode<synchronous>, transform_indices = @transform_5, window_bounds = array<i64: 96, 1>}, {transform_indices = @transform_6, window_bounds = array<i64: 1, 96, 20>}]} {
    %c0 = arith.constant 0 : index
    %c0_0 = arith.constant 0 : index
    %0 = vector.load %arg3[%c0, %c0_0] : memref<24x27xf32, #tpu.memory_space<vmem>>, vector<24x27xf32>
    %c0_1 = arith.constant 0 : index
    %c0_2 = arith.constant 0 : index
    %c0_3 = arith.constant 0 : index
    %1 = vector.load %arg1[%c0_1, %c0_2, %c0_3] : memref<1x27x104xf32, #tpu.memory_space<vmem>>, vector<1x27x104xf32>
    %2 = vector.shape_cast %1 : vector<1x27x104xf32> to vector<27x104xf32>
    %cst = arith.constant dense<0.000000e+00> : vector<24x104xf32>
    %3 = tpu.matmul %0, %2, %cst {dimension_numbers = #tpu.dot_dimension_numbers<[1], [0], [0], [1], [0, 0, 1, 1], [], []>} : vector<24x27xf32>, vector<27x104xf32>, vector<24x104xf32> -> vector<24x104xf32>
    %c0_4 = arith.constant 0 : index
    %c0_5 = arith.constant 0 : index
    %4 = vector.load %arg4[%c0_4, %c0_5] : memref<24x1xf32, #tpu.memory_space<vmem>>, vector<24x1xf32>
    %5 = vector.broadcast %4 : vector<24x1xf32> to vector<24x104xf32>
    %6 = arith.addf %3, %5 : vector<24x104xf32>
    %cst_6 = arith.constant 0.000000e+00 : f32
    %7 = vector.broadcast %cst_6 : f32 to vector<24x104xf32>
    %8 = arith.maximumf %6, %7 : vector<24x104xf32>
    %c0_7 = arith.constant 0 : index
    %c0_8 = arith.constant 0 : index
    %9 = vector.load %arg2[%c0_7, %c0_8] : memref<1x104xf32, #tpu.memory_space<vmem>>, vector<1x104xf32>
    %10 = vector.broadcast %9 : vector<1x104xf32> to vector<24x104xf32>
    %11 = arith.mulf %8, %10 : vector<24x104xf32>
    %c0_9 = arith.constant 0 : index
    %c0_10 = arith.constant 0 : index
    %12 = vector.load %arg8[%c0_9, %c0_10] : memref<24x104xf32, #tpu.memory_space<vmem>>, vector<24x104xf32>
    tpu.vector_store %arg8[%c0_9, %c0_10], %11 {strides = array<i32>} : memref<24x104xf32, #tpu.memory_space<vmem>>, vector<24x104xf32>,
    %c0_11 = arith.constant 0 : index
    %c0_12 = arith.constant 0 : index
    %13 = vector.load %arg8[%c0_11, %c0_12] : memref<24x104xf32, #tpu.memory_space<vmem>>, vector<24x20xf32>
    %c0_13 = arith.constant 0 : index
    %c26 = arith.constant 26 : index
    %14 = vector.load %arg8[%c0_13, %c26] : memref<24x104xf32, #tpu.memory_space<vmem>>, vector<24x20xf32>
    %c0_14 = arith.constant 0 : index
    %c1 = arith.constant 1 : index
    %15 = vector.load %arg8[%c0_14, %c1] : memref<24x104xf32, #tpu.memory_space<vmem>>, vector<24x20xf32>
    %c0_15 = arith.constant 0 : index
    %c52 = arith.constant 52 : index
    %16 = vector.load %arg8[%c0_15, %c52] : memref<24x104xf32, #tpu.memory_space<vmem>>, vector<24x20xf32>
    %c0_16 = arith.constant 0 : index
    %c78 = arith.constant 78 : index
    %17 = vector.load %arg8[%c0_16, %c78] : memref<24x104xf32, #tpu.memory_space<vmem>>, vector<24x20xf32>
    %c0_17 = arith.constant 0 : index
    %c53 = arith.constant 53 : index
    %18 = vector.load %arg8[%c0_17, %c53] : memref<24x104xf32, #tpu.memory_space<vmem>>, vector<24x20xf32>
    %c0_18 = arith.constant 0 : index
    %c5 = arith.constant 5 : index
    %19 = vector.load %arg8[%c0_18, %c5] : memref<24x104xf32, #tpu.memory_space<vmem>>, vector<24x20xf32>
    %c0_19 = arith.constant 0 : index
    %c31 = arith.constant 31 : index
    %20 = vector.load %arg8[%c0_19, %c31] : memref<24x104xf32, #tpu.memory_space<vmem>>, vector<24x20xf32>
    %c0_20 = arith.constant 0 : index
    %c6 = arith.constant 6 : index
    %21 = vector.load %arg8[%c0_20, %c6] : memref<24x104xf32, #tpu.memory_space<vmem>>, vector<24x20xf32>
    %22 = tpu.concatenate %13, %14, %15, %16, %17, %18, %19, %20, %21 in 0 : vector<24x20xf32>, vector<24x20xf32>, vector<24x20xf32>, vector<24x20xf32>, vector<24x20xf32>, vector<24x20xf32>, vector<24x20xf32>, vector<24x20xf32>, vector<24x20xf32> -> vector<216x20xf32>
    %c0_21 = arith.constant 0 : index
    %c0_22 = arith.constant 0 : index
    %23 = vector.load %arg5[%c0_21, %c0_22] : memref<96x216xf32, #tpu.memory_space<vmem>>, vector<96x216xf32>
    %cst_23 = arith.constant dense<0.000000e+00> : vector<96x20xf32>
    %24 = tpu.matmul %23, %22, %cst_23 {dimension_numbers = #tpu.dot_dimension_numbers<[1], [0], [0], [1], [0, 0, 1, 1], [], []>} : vector<96x216xf32>, vector<216x20xf32>, vector<96x20xf32> -> vector<96x20xf32>
    %c0_24 = arith.constant 0 : index
    %c0_25 = arith.constant 0 : index
    %25 = vector.load %arg6[%c0_24, %c0_25] : memref<96x1xf32, #tpu.memory_space<vmem>>, vector<96x1xf32>
    %26 = vector.broadcast %25 : vector<96x1xf32> to vector<96x20xf32>
    %27 = arith.addf %24, %26 : vector<96x20xf32>
    %c0_26 = arith.constant 0 : index
    %c0_27 = arith.constant 0 : index
    %c0_28 = arith.constant 0 : index
    %28 = vector.load %arg7[%c0_26, %c0_27, %c0_28] : memref<1x96x20xf32, #tpu.memory_space<vmem>>, vector<1x96x20xf32>
    %29 = vector.shape_cast %28 : vector<1x96x20xf32> to vector<96x20xf32>
    %30 = vector.shape_cast %27 : vector<96x20xf32> to vector<1x96x20xf32>
    tpu.vector_store %arg7[%c0_26, %c0_27, %c0_28], %30 {strides = array<i32>} : memref<1x96x20xf32, #tpu.memory_space<vmem>>, vector<1x96x20xf32>,
    return
  }
  func.func @transform_0(%arg0: i32) -> (i32, i32, i32) {
    %c0_i32 = arith.constant 0 : i32
    %c0_i32_0 = arith.constant 0 : i32
    %c0_i32_1 = arith.constant 0 : i32
    return %arg0, %c0_i32, %c0_i32_0 : i32, i32, i32
  }
  func.func @transform_1(%arg0: i32) -> (i32, i32) {
    %c0_i32 = arith.constant 0 : i32
    %c0_i32_0 = arith.constant 0 : i32
    %c0_i32_1 = arith.constant 0 : i32
    return %c0_i32, %c0_i32_0 : i32, i32
  }
  func.func @transform_2(%arg0: i32) -> (i32, i32) {
    %c0_i32 = arith.constant 0 : i32
    %c0_i32_0 = arith.constant 0 : i32
    %c0_i32_1 = arith.constant 0 : i32
    return %c0_i32, %c0_i32_0 : i32, i32
  }
  func.func @transform_3(%arg0: i32) -> (i32, i32) {
    %c0_i32 = arith.constant 0 : i32
    %c0_i32_0 = arith.constant 0 : i32
    %c0_i32_1 = arith.constant 0 : i32
    return %c0_i32, %c0_i32_0 : i32, i32
  }
  func.func @transform_4(%arg0: i32) -> (i32, i32) {
    %c0_i32 = arith.constant 0 : i32
    %c0_i32_0 = arith.constant 0 : i32
    %c0_i32_1 = arith.constant 0 : i32
    return %c0_i32, %c0_i32_0 : i32, i32
  }
  func.func @transform_5(%arg0: i32) -> (i32, i32) {
    %c0_i32 = arith.constant 0 : i32
    %c0_i32_0 = arith.constant 0 : i32
    %c0_i32_1 = arith.constant 0 : i32
    return %c0_i32, %c0_i32_0 : i32, i32
  }
  func.func @transform_6(%arg0: i32) -> (i32, i32, i32) {
    %c0_i32 = arith.constant 0 : i32
    %c0_i32_0 = arith.constant 0 : i32
    %c0_i32_1 = arith.constant 0 : i32
    return %arg0, %c0_i32, %c0_i32_0 : i32, i32, i32
  }
}

</mosaic_0001>

<llo_original>
// kernel: tpu_custom_call.1
$region0: #{tpu_custom_call.1}
  #allocation0 [shape = 'u32[]', space=smem, size = 0x4, offset = 0x4, fixed_abs, tag = 'smem constant byte address 0x4 - core index']
  #allocation1 [shape = 'u32[72,128]{1,0:T(1,128)}', space=vmem, size = 0x9000, scoped, tag = 'internal scratch']
  #allocation2 [shape = 'f32[24,104]{1,0:T(8,128)}', space=vmem, size = 0x3000, scoped, tag = 'scratch operand']
  %s0 = inlined_call_operand.vmem [shape: f32[2,27,104], index: 0, kind: input, shape index: {}]
  %s1 = inlined_call_operand.vmem [shape: f32[1,104], index: 1, kind: input, shape index: {}]
  %s2 = inlined_call_operand.vmem [shape: f32[24,27], index: 2, kind: input, shape index: {}]
  %s3 = inlined_call_operand.vmem [shape: f32[24,1], index: 3, kind: input, shape index: {}]
  %s4 = inlined_call_operand.vmem [shape: f32[96,216], index: 4, kind: input, shape index: {}]
  %s5 = inlined_call_operand.vmem [shape: f32[96,1], index: 5, kind: input, shape index: {}]
  %s6 = inlined_call_operand.vmem [shape: f32[2,96,20], index: 6, kind: output, shape index: {}]
  %s7 = sld [smem:[#allocation0]]
  $region57: #{tpu_custom_call.1} parent=0
    _
  %s9 = ssub.s32 1, %s7
  %s10 = scalar_select 0, %s9, %s7
  loop: start=0, step=1, limit=4
  $region2: #{tpu_custom_call.1} parent=0 // loop_pre_header
    _
  $region3: #{tpu_custom_call.1} parent=0 // loop_header
    %s12 = sphi 0, %s16
    %p13 = scmp.ge.s32.totalorder %s12, 4
    %s22 = sphi 0, %s24
    %s25 = sphi 0, %s22
    %s26 = sphi 0, %s25
    %s42 = sphi 0, %s26
    %s46 = sphi 0, %s46
    %s48 = sphi 0, %s46
    %s49 = sphi 0, %s48
    %s63 = sphi 0, %s49
    %s67 = sphi 0, %s67
    %s69 = sphi 0, %s67
    %s70 = sphi 0, %s69
    %s84 = sphi 0, %s70
    %s88 = sphi 0, %s88
    %s90 = sphi 0, %s88
    %s91 = sphi 0, %s90
    %s105 = sphi 0, %s91
    %s109 = sphi 0, %s109
    %s111 = sphi 0, %s109
    %s112 = sphi 0, %s111
    %s126 = sphi 0, %s112
    %s130 = sphi 0, %s130
    %s132 = sphi 0, %s130
    %s133 = sphi 0, %s132
    %s147 = sphi 0, %s133
    %s153 = sphi 0, %s155
    %s156 = sphi 0, %s153
    %s157 = sphi 0, %s156
    %s173 = sphi 0, %s157
  $region4: #{tpu_custom_call.1} parent=0 // loop_header_branch
    %15 = sbr.rel (%p13) target = $region8
  $region5: #{tpu_custom_call.1} parent=0 // loop_body
    %s17 = ssub.s32 %s12, 1
    %s18 = ssub.s32 %s12, 2
    %s19 = sadd.s32 %s12, 1
    %s20 = ssub.s32 %s12, %s19
    %p21 = scmp.eq.s32.totalorder %s20, 0
    %s23 = sadd.s32 %s22, 1
    %s24 = scalar_select %p21, %s22, %s23
    %p27 = pneg %p21
    %p28 = scmp.eq.s32.totalorder %s12, 1
    %p29 = por %p27, %p28
    %p30 = scmp.ne.s32.totalorder %s22, %s25
    %p31 = scmp.eq.s32.totalorder %s12, 0
    %p32 = por %p30, %p31
    %p33 = scmp.ne.s32.totalorder %s22, %s25
    %p34 = scmp.eq.s32.totalorder %s17, 1
    %p35 = por %p33, %p34
    %p36 = scmp.ne.s32.totalorder %s25, %s26
    %p37 = scmp.eq.s32.totalorder %s17, 0
    %p38 = por %p36, %p37
    %p39 = scmp.ne.s32.totalorder %s25, %s26
    %p40 = scmp.eq.s32.totalorder %s18, 1
    %p41 = por %p39, %p40
    %p43 = scmp.ne.s32.totalorder %s26, %s42
    %p44 = scmp.eq.s32.totalorder %s18, 0
    %p45 = por %p43, %p44
    %s47 = sadd.s32 %s46, 1
    %p50 = scmp.eq.s32.totalorder %s12, 1
    %p51 = scmp.ne.s32.totalorder %s46, %s48
    %p52 = scmp.eq.s32.totalorder %s12, 0
    %p53 = por %p51, %p52
    %p54 = scmp.ne.s32.totalorder %s46, %s48
    %p55 = scmp.eq.s32.totalorder %s17, 1
    %p56 = por %p54, %p55
    %p57 = scmp.ne.s32.totalorder %s48, %s49
    %p58 = scmp.eq.s32.totalorder %s17, 0
    %p59 = por %p57, %p58
    %p60 = scmp.ne.s32.totalorder %s48, %s49
    %p61 = scmp.eq.s32.totalorder %s18, 1
    %p62 = por %p60, %p61
    %p64 = scmp.ne.s32.totalorder %s49, %s63
    %p65 = scmp.eq.s32.totalorder %s18, 0
    %p66 = por %p64, %p65
    %s68 = sadd.s32 %s67, 1
    %p71 = scmp.eq.s32.totalorder %s12, 1
    %p72 = scmp.ne.s32.totalorder %s67, %s69
    %p73 = scmp.eq.s32.totalorder %s12, 0
    %p74 = por %p72, %p73
    %p75 = scmp.ne.s32.totalorder %s67, %s69
    %p76 = scmp.eq.s32.totalorder %s17, 1
    %p77 = por %p75, %p76
    %p78 = scmp.ne.s32.totalorder %s69, %s70
    %p79 = scmp.eq.s32.totalorder %s17, 0
    %p80 = por %p78, %p79
    %p81 = scmp.ne.s32.totalorder %s69, %s70
    %p82 = scmp.eq.s32.totalorder %s18, 1
    %p83 = por %p81, %p82
    %p85 = scmp.ne.s32.totalorder %s70, %s84
    %p86 = scmp.eq.s32.totalorder %s18, 0
    %p87 = por %p85, %p86
    %s89 = sadd.s32 %s88, 1
    %p92 = scmp.eq.s32.totalorder %s12, 1
    %p93 = scmp.ne.s32.totalorder %s88, %s90
    %p94 = scmp.eq.s32.totalorder %s12, 0
    %p95 = por %p93, %p94
    %p96 = scmp.ne.s32.totalorder %s88, %s90
    %p97 = scmp.eq.s32.totalorder %s17, 1
    %p98 = por %p96, %p97
    %p99 = scmp.ne.s32.totalorder %s90, %s91
    %p100 = scmp.eq.s32.totalorder %s17, 0
    %p101 = por %p99, %p100
    %p102 = scmp.ne.s32.totalorder %s90, %s91
    %p103 = scmp.eq.s32.totalorder %s18, 1
    %p104 = por %p102, %p103
    %p106 = scmp.ne.s32.totalorder %s91, %s105
    %p107 = scmp.eq.s32.totalorder %s18, 0
    %p108 = por %p106, %p107
    %s110 = sadd.s32 %s109, 1
    %p113 = scmp.eq.s32.totalorder %s12, 1
    %p114 = scmp.ne.s32.totalorder %s109, %s111
    %p115 = scmp.eq.s32.totalorder %s12, 0
    %p116 = por %p114, %p115
    %p117 = scmp.ne.s32.totalorder %s109, %s111
    %p118 = scmp.eq.s32.totalorder %s17, 1
    %p119 = por %p117, %p118
    %p120 = scmp.ne.s32.totalorder %s111, %s112
    %p121 = scmp.eq.s32.totalorder %s17, 0
    %p122 = por %p120, %p121
    %p123 = scmp.ne.s32.totalorder %s111, %s112
    %p124 = scmp.eq.s32.totalorder %s18, 1
    %p125 = por %p123, %p124
    %p127 = scmp.ne.s32.totalorder %s112, %s126
    %p128 = scmp.eq.s32.totalorder %s18, 0
    %p129 = por %p127, %p128
    %s131 = sadd.s32 %s130, 1
    %p134 = scmp.eq.s32.totalorder %s12, 1
    %p135 = scmp.ne.s32.totalorder %s130, %s132
    %p136 = scmp.eq.s32.totalorder %s12, 0
    %p137 = por %p135, %p136
    %p138 = scmp.ne.s32.totalorder %s130, %s132
    %p139 = scmp.eq.s32.totalorder %s17, 1
    %p140 = por %p138, %p139
    %p141 = scmp.ne.s32.totalorder %s132, %s133
    %p142 = scmp.eq.s32.totalorder %s17, 0
    %p143 = por %p141, %p142
    %p144 = scmp.ne.s32.totalorder %s132, %s133
    %p145 = scmp.eq.s32.totalorder %s18, 1
    %p146 = por %p144, %p145
    %p148 = scmp.ne.s32.totalorder %s133, %s147
    %p149 = scmp.eq.s32.totalorder %s18, 0
    %p150 = por %p148, %p149
    %s151 = ssub.s32 %s12, %s19
    %p152 = scmp.eq.s32.totalorder %s151, 0
    %s154 = sadd.s32 %s153, 1
    %s155 = scalar_select %p152, %s153, %s154
    %p158 = pneg %p152
    %p159 = scmp.eq.s32.totalorder %s12, 1
    %p160 = por %p158, %p159
    %p161 = scmp.ne.s32.totalorder %s153, %s156
    %p162 = scmp.eq.s32.totalorder %s12, 0
    %p163 = por %p161, %p162
    %p164 = scmp.ne.s32.totalorder %s153, %s156
    %p165 = scmp.eq.s32.totalorder %s17, 1
    %p166 = por %p164, %p165
    %p167 = scmp.ne.s32.totalorder %s156, %s157
    %p168 = scmp.eq.s32.totalorder %s17, 0
    %p169 = por %p167, %p168
    %p170 = scmp.ne.s32.totalorder %s156, %s157
    %p171 = scmp.eq.s32.totalorder %s18, 1
    %p172 = por %p170, %p171
    %p174 = scmp.ne.s32.totalorder %s157, %s173
    %p175 = scmp.eq.s32.totalorder %s18, 0
    %p176 = por %p174, %p175
    %p177 = scmp.le.s32.totalorder 1, %s12
    %p178 = scmp.lt.s32.totalorder %s12, 3
    %p179 = pnand %p177, %p178
    %p180 = pneg %p179
    // Predicated region
    $region9: #{tpu_custom_call.1} parent=5 // pred_check
      _
    $region10: #{tpu_custom_call.1} parent=5 // pred_check_branch
      %182 = sbr.rel (%p179) target = $region12
    $region11: #{tpu_custom_call.1} parent=5 // pred_region
      %s183 = ssub.s32 %s12, 1
      // Predicated region
      $region13: #{tpu_custom_call.1} parent=11 // pred_check
        %p184 = pneg %p59
      $region14: #{tpu_custom_call.1} parent=11 // pred_check_branch
        %186 = sbr.rel (%p184) target = $region16
      $region15: #{tpu_custom_call.1} parent=11 // pred_region
        _
      $region16: #{tpu_custom_call.1} parent=11 // pred_fallthru
        _
      // Predicated region
      $region17: #{tpu_custom_call.1} parent=11 // pred_check
        %p187 = pneg %p80
      $region18: #{tpu_custom_call.1} parent=11 // pred_check_branch
        %189 = sbr.rel (%p187) target = $region20
      $region19: #{tpu_custom_call.1} parent=11 // pred_region
        _
      $region20: #{tpu_custom_call.1} parent=11 // pred_fallthru
        _
      // Predicated region
      $region21: #{tpu_custom_call.1} parent=11 // pred_check
        %p190 = pneg %p101
      $region22: #{tpu_custom_call.1} parent=11 // pred_check_branch
        %192 = sbr.rel (%p190) target = $region24
      $region23: #{tpu_custom_call.1} parent=11 // pred_region
        _
      $region24: #{tpu_custom_call.1} parent=11 // pred_fallthru
        _
      // Predicated region
      $region25: #{tpu_custom_call.1} parent=11 // pred_check
        %p193 = pneg %p122
      $region26: #{tpu_custom_call.1} parent=11 // pred_check_branch
        %195 = sbr.rel (%p193) target = $region28
      $region27: #{tpu_custom_call.1} parent=11 // pred_region
        _
      $region28: #{tpu_custom_call.1} parent=11 // pred_fallthru
        _
      // Predicated region
      $region29: #{tpu_custom_call.1} parent=11 // pred_check
        %p196 = pneg %p143
      $region30: #{tpu_custom_call.1} parent=11 // pred_check_branch
        %198 = sbr.rel (%p196) target = $region32
      $region31: #{tpu_custom_call.1} parent=11 // pred_region
        _
      $region32: #{tpu_custom_call.1} parent=11 // pred_fallthru
        _
    $region12: #{tpu_custom_call.1} parent=5 // pred_fallthru
      _
    %p199 = scmp.lt.s32.totalorder %s12, 2
    // Predicated region
    $region33: #{tpu_custom_call.1} parent=5 // pred_check
      %p200 = pneg %p199
    $region34: #{tpu_custom_call.1} parent=5 // pred_check_branch
      %202 = sbr.rel (%p200) target = $region36
    $region35: #{tpu_custom_call.1} parent=5 // pred_region
      // Predicated region
      $region37: #{tpu_custom_call.1} parent=35 // pred_check
        %p203 = pneg %p32
      $region38: #{tpu_custom_call.1} parent=35 // pred_check_branch
        %205 = sbr.rel (%p203) target = $region40
      $region39: #{tpu_custom_call.1} parent=35 // pred_region
        %p206 = scmp.lt.s32.totalorder %s12, 1
        %s207 = scalar_select %p206, %s12, 1
        %s208 = smul.addr %s207, 4
        %s209 = smul.addr %s208, 8
        %s210 = scalar_lea.vmem %s0, %s209
      $region40: #{tpu_custom_call.1} parent=35 // pred_fallthru
        _
    $region36: #{tpu_custom_call.1} parent=5 // pred_fallthru
      _
    %p211 = scmp.le.s32.totalorder 1, %s12
    %p212 = scmp.lt.s32.totalorder %s12, 3
    %p213 = pnand %p211, %p212
    %p214 = pneg %p213
    // Predicated region
    $region41: #{tpu_custom_call.1} parent=5 // pred_check
      _
    $region42: #{tpu_custom_call.1} parent=5 // pred_check_branch
      %216 = sbr.rel (%p213) target = $region44
    $region43: #{tpu_custom_call.1} parent=5 // pred_region
      %s217 = ssub.s32 %s12, 1
      %p218 = scmp.lt.s32.totalorder %s17, 1
      %s219 = scalar_select %p218, %s17, 1
      %s220 = smul.addr %s219, 4
      %s221 = smul.addr %s220, 8
      %s222 = scalar_lea.vmem %s0, %s221
      %p223 = pneg %p38
      %p224 = pneg %p35
      %p225 = pneg %p59
      %p226 = pneg %p56
      %p227 = pneg %p80
      %p228 = pneg %p77
      %p229 = pneg %p101
      %p230 = pneg %p98
      %p231 = pneg %p122
      %p232 = pneg %p119
      %p233 = pneg %p143
      %p234 = pneg %p140
      %p235 = pneg %p169
      %p236 = pneg %p166
      %p237 = scmp.lt.s32.totalorder %s17, 1
      %s238 = scalar_select %p237, %s17, 1
      %s239 = smul.addr %s238, 12
      %s240 = smul.addr %s239, 8
      %s241 = scalar_lea.vmem %s6, %s240
      %p242 = scmp.lt.s32.totalorder %s17, 1
      %s243 = scalar_select %p242, %s17, 1
      %s244 = smul.addr %s243, 4
      %s245 = smul.addr %s244, 8
      %s246 = scalar_lea.vmem %s0, %s245
      %p247 = scmp.lt.s32.totalorder %s17, 1
      %s248 = scalar_select %p247, %s17, 1
      %s249 = smul.addr %s248, 12
      %s250 = smul.addr %s249, 8
      %s251 = scalar_lea.vmem %s6, %s250
      %v252 = vld [vmem:[%s2] sm:$0xff]
      %v253 = vld [vmem:[%s2 + $0x8] sm:$0xff]
      %v254 = vld [vmem:[%s2 + $0x10] sm:$0xff]
      %v255 = vld [vmem:[%s246] sm:$0xff]
      %v256 = vld [vmem:[%s246 + $0x8] sm:$0xff]
      %v257 = vld [vmem:[%s246 + $0x10] sm:$0xff]
      %v258 = vld [vmem:[%s246 + $0x18] sm:$0x7]
      %v259 = vld [vmem:[%s3] sm:$0xff]
      %v260 = vld [vmem:[%s3 + $0x8] sm:$0xff]
      %v261 = vld [vmem:[%s3 + $0x10] sm:$0xff]
      %263 = vset.pattern.permute.xlu0 0
      %264 = vperm.xlu0 %263, %v259
      %v265 = vpop.permute.xlu0 %264
      %268 = vset.pattern.permute.xlu0 0
      %269 = vperm.xlu0 %268, %v260
      %v270 = vpop.permute.xlu0 %269
      %273 = vset.pattern.permute.xlu0 0
      %274 = vperm.xlu0 %273, %v261
      %v275 = vpop.permute.xlu0 %274
      %vm277 = vcmask 220160
      %v279 = vsel %vm277, %v252, 0
      %v282 = vsel %vm277, %v253, 0
      %v285 = vsel %vm277, %v254, 0
      %vm287 = vcmask 1042432
      %v289 = vsel %vm287, %v258, 0
      %291 = vmatpush.msra.mxu0 0.0
      %292 = vmatpush.msra.mxu0 0.0
      %293 = vmatpush.msra.mxu0 0.0
      %294 = vmatpush.msra.mxu0 0.0
      %295 = vmatpush.msra.mxu0 0.0
      %296 = vmatpush.msra.mxu0 0.0
      %297 = vmatpush.msra.mxu0 0.0
      %298 = vmatpush.msra.mxu0 0.0
      %299 = vmatpush.msra.mxu0 0.0
      %300 = vmatpush.msra.mxu0 0.0
      %301 = vmatpush.msra.mxu0 0.0
      %302 = vmatpush.msra.mxu0 0.0
      %303 = vmatpush.msra.mxu0 %v289
      %304 = vmatpush.msra.mxu0 %v257
      %305 = vmatpush.msra.mxu0 %v256
      %306 = vmatpush.msra.mxu0 %v255
      %307 = vmatmul.f32.gmra.mxu0 %v279
      %v308 = vpop.f32.mrf.mxu0
      %v309 = vadd.f32 %v265, %v308
      %310 = vmatmul.f32.gmra.mxu0 %v282
      %v311 = vpop.f32.mrf.mxu0
      %v312 = vadd.f32 %v270, %v311
      %313 = vmatmul.f32.gmra.mxu0 %v285
      %v314 = vpop.f32.mrf.mxu0
      %v315 = vadd.f32 %v275, %v314
      %316 = vdwg.mxu0
      %v317 = vmax.f32 %v309, 0.0
      %v318 = vmax.f32 %v312, 0.0
      %v319 = vmax.f32 %v315, 0.0
      %v320 = vld [vmem:[%s1] sm:$0x1]
      %v322 = vperm.slane %v320, 0
      %v324 = vmul.f32 %v317, %v322
      %v325 = vmul.f32 %v318, %v322
      %v326 = vmul.f32 %v319, %v322
      %vm327 = vcmask 850944
      %328 = vst.msk [vmem:[#allocation2] sm:$0xff] %vm327, %v324
      %329 = vst.msk [vmem:[#allocation2 + $0x8] sm:$0xff] %vm327, %v325
      %330 = vst.msk [vmem:[#allocation2 + $0x10] sm:$0xff] %vm327, %v326
      %v331 = vld [vmem:[#allocation2] sm:$0xff]
      %v332 = vld [vmem:[#allocation2 + $0x8] sm:$0xff]
      %v333 = vld [vmem:[#allocation2 + $0x10] sm:$0xff]
      %337 = vrot.lane.b32.xlu0 %v331, 102
      %v338 = vpop.permute.xlu0 %337
      %339 = vrot.lane.b32.xlu0 %v332, 102
      %v340 = vpop.permute.xlu0 %339
      %341 = vrot.lane.b32.xlu0 %v333, 102
      %v342 = vpop.permute.xlu0 %341
      %346 = vrot.lane.b32.xlu0 %v331, 127
      %v347 = vpop.permute.xlu0 %346
      %348 = vrot.lane.b32.xlu0 %v332, 127
      %v349 = vpop.permute.xlu0 %348
      %350 = vrot.lane.b32.xlu0 %v333, 127
      %v351 = vpop.permute.xlu0 %350
      %355 = vrot.lane.b32.xlu0 %v331, 76
      %v356 = vpop.permute.xlu0 %355
      %357 = vrot.lane.b32.xlu0 %v332, 76
      %v358 = vpop.permute.xlu0 %357
      %359 = vrot.lane.b32.xlu0 %v333, 76
      %v360 = vpop.permute.xlu0 %359
      %364 = vrot.lane.b32.xlu0 %v331, 50
      %v365 = vpop.permute.xlu0 %364
      %366 = vrot.lane.b32.xlu0 %v332, 50
      %v367 = vpop.permute.xlu0 %366
      %368 = vrot.lane.b32.xlu0 %v333, 50
      %v369 = vpop.permute.xlu0 %368
      %373 = vrot.lane.b32.xlu0 %v331, 75
      %v374 = vpop.permute.xlu0 %373
      %375 = vrot.lane.b32.xlu0 %v332, 75
      %v376 = vpop.permute.xlu0 %375
      %377 = vrot.lane.b32.xlu0 %v333, 75
      %v378 = vpop.permute.xlu0 %377
      %382 = vrot.lane.b32.xlu0 %v331, 123
      %v383 = vpop.permute.xlu0 %382
      %384 = vrot.lane.b32.xlu0 %v332, 123
      %v385 = vpop.permute.xlu0 %384
      %386 = vrot.lane.b32.xlu0 %v333, 123
      %v387 = vpop.permute.xlu0 %386
      %391 = vrot.lane.b32.xlu0 %v331, 97
      %v392 = vpop.permute.xlu0 %391
      %393 = vrot.lane.b32.xlu0 %v332, 97
      %v394 = vpop.permute.xlu0 %393
      %395 = vrot.lane.b32.xlu0 %v333, 97
      %v396 = vpop.permute.xlu0 %395
      %400 = vrot.lane.b32.xlu0 %v331, 122
      %v401 = vpop.permute.xlu0 %400
      %402 = vrot.lane.b32.xlu0 %v332, 122
      %v403 = vpop.permute.xlu0 %402
      %404 = vrot.lane.b32.xlu0 %v333, 122
      %v405 = vpop.permute.xlu0 %404
      %v409 = vld [vmem:[%s4] sm:$0xff]
      %v410 = vld [vmem:[%s4 + $0x8] sm:$0xff]
      %v411 = vld [vmem:[%s4 + $0x10] sm:$0xff]
      %v412 = vld [vmem:[%s4 + $0x18] sm:$0xff]
      %v413 = vld [vmem:[%s4 + $0x20] sm:$0xff]
      %v414 = vld [vmem:[%s4 + $0x28] sm:$0xff]
      %v415 = vld [vmem:[%s4 + $0x30] sm:$0xff]
      %v416 = vld [vmem:[%s4 + $0x38] sm:$0xff]
      %v417 = vld [vmem:[%s4 + $0x40] sm:$0xff]
      %v418 = vld [vmem:[%s4 + $0x48] sm:$0xff]
      %v419 = vld [vmem:[%s4 + $0x50] sm:$0xff]
      %v420 = vld [vmem:[%s4 + $0x58] sm:$0xff]
      %v421 = vld [vmem:[%s4 + $0x60] sm:$0xff]
      %v422 = vld [vmem:[%s4 + $0x68] sm:$0xff]
      %v423 = vld [vmem:[%s4 + $0x70] sm:$0xff]
      %v424 = vld [vmem:[%s4 + $0x78] sm:$0xff]
      %v425 = vld [vmem:[%s4 + $0x80] sm:$0xff]
      %v426 = vld [vmem:[%s4 + $0x88] sm:$0xff]
      %v427 = vld [vmem:[%s4 + $0x90] sm:$0xff]
      %v428 = vld [vmem:[%s4 + $0x98] sm:$0xff]
      %v429 = vld [vmem:[%s4 + $0xa0] sm:$0xff]
      %v430 = vld [vmem:[%s4 + $0xa8] sm:$0xff]
      %v431 = vld [vmem:[%s4 + $0xb0] sm:$0xff]
      %v432 = vld [vmem:[%s4 + $0xb8] sm:$0xff]
      %v433 = vld [vmem:[%s5] sm:$0xff]
      %v434 = vld [vmem:[%s5 + $0x8] sm:$0xff]
      %v435 = vld [vmem:[%s5 + $0x10] sm:$0xff]
      %v436 = vld [vmem:[%s5 + $0x18] sm:$0xff]
      %v437 = vld [vmem:[%s5 + $0x20] sm:$0xff]
      %v438 = vld [vmem:[%s5 + $0x28] sm:$0xff]
      %v439 = vld [vmem:[%s5 + $0x30] sm:$0xff]
      %v440 = vld [vmem:[%s5 + $0x38] sm:$0xff]
      %v441 = vld [vmem:[%s5 + $0x40] sm:$0xff]
      %v442 = vld [vmem:[%s5 + $0x48] sm:$0xff]
      %v443 = vld [vmem:[%s5 + $0x50] sm:$0xff]
      %v444 = vld [vmem:[%s5 + $0x58] sm:$0xff]
      %446 = vset.pattern.permute.xlu0 0
      %447 = vperm.xlu0 %446, %v433
      %v448 = vpop.permute.xlu0 %447
      %451 = vset.pattern.permute.xlu0 0
      %452 = vperm.xlu0 %451, %v434
      %v453 = vpop.permute.xlu0 %452
      %456 = vset.pattern.permute.xlu0 0
      %457 = vperm.xlu0 %456, %v435
      %v458 = vpop.permute.xlu0 %457
      %461 = vset.pattern.permute.xlu0 0
      %462 = vperm.xlu0 %461, %v436
      %v463 = vpop.permute.xlu0 %462
      %466 = vset.pattern.permute.xlu0 0
      %467 = vperm.xlu0 %466, %v437
      %v468 = vpop.permute.xlu0 %467
      %471 = vset.pattern.permute.xlu0 0
      %472 = vperm.xlu0 %471, %v438
      %v473 = vpop.permute.xlu0 %472
      %476 = vset.pattern.permute.xlu0 0
      %477 = vperm.xlu0 %476, %v439
      %v478 = vpop.permute.xlu0 %477
      %481 = vset.pattern.permute.xlu0 0
      %482 = vperm.xlu0 %481, %v440
      %v483 = vpop.permute.xlu0 %482
      %486 = vset.pattern.permute.xlu0 0
      %487 = vperm.xlu0 %486, %v441
      %v488 = vpop.permute.xlu0 %487
      %491 = vset.pattern.permute.xlu0 0
      %492 = vperm.xlu0 %491, %v442
      %v493 = vpop.permute.xlu0 %492
      %496 = vset.pattern.permute.xlu0 0
      %497 = vperm.xlu0 %496, %v443
      %v498 = vpop.permute.xlu0 %497
      %501 = vset.pattern.permute.xlu0 0
      %502 = vperm.xlu0 %501, %v444
      %v503 = vpop.permute.xlu0 %502
      %vm505 = vcmask 719872
      %v507 = vsel %vm505, %v410, 0
      %v510 = vsel %vm505, %v412, 0
      %v513 = vsel %vm505, %v414, 0
      %v516 = vsel %vm505, %v416, 0
      %v519 = vsel %vm505, %v418, 0
      %v522 = vsel %vm505, %v420, 0
      %v525 = vsel %vm505, %v422, 0
      %v528 = vsel %vm505, %v424, 0
      %v531 = vsel %vm505, %v426, 0
      %v534 = vsel %vm505, %v428, 0
      %v537 = vsel %vm505, %v430, 0
      %v540 = vsel %vm505, %v432, 0
      %542 = vmatpush.msra.mxu0 %v374
      %543 = vmatpush.msra.mxu0 %v369
      %544 = vmatpush.msra.mxu0 %v367
      %545 = vmatpush.msra.mxu0 %v365
      %546 = vmatpush.msra.mxu0 %v360
      %547 = vmatpush.msra.mxu0 %v358
      %548 = vmatpush.msra.mxu0 %v356
      %549 = vmatpush.msra.mxu0 %v351
      %550 = vmatpush.msra.mxu0 %v349
      %551 = vmatpush.msra.mxu0 %v347
      %552 = vmatpush.msra.mxu0 %v342
      %553 = vmatpush.msra.mxu0 %v340
      %554 = vmatpush.msra.mxu0 %v338
      %555 = vmatpush.msra.mxu0 %v333
      %556 = vmatpush.msra.mxu0 %v332
      %557 = vmatpush.msra.mxu0 %v331
      %558 = vmatmul.f32.gmra.mxu0 %v409
      %v559 = vpop.f32.mrf.mxu0
      %v560 = vadd.f32 %v448, %v559
      %561 = vmatmul.f32.gmra.mxu0 %v411
      %v562 = vpop.f32.mrf.mxu0
      %v563 = vadd.f32 %v453, %v562
      %564 = vmatmul.f32.gmra.mxu0 %v413
      %v565 = vpop.f32.mrf.mxu0
      %v566 = vadd.f32 %v458, %v565
      %567 = vmatmul.f32.gmra.mxu0 %v415
      %v568 = vpop.f32.mrf.mxu0
      %v569 = vadd.f32 %v463, %v568
      %570 = vmatmul.f32.gmra.mxu0 %v417
      %v571 = vpop.f32.mrf.mxu0
      %v572 = vadd.f32 %v468, %v571
      %573 = vmatmul.f32.gmra.mxu0 %v419
      %v574 = vpop.f32.mrf.mxu0
      %v575 = vadd.f32 %v473, %v574
      %576 = vmatmul.f32.gmra.mxu0 %v421
      %v577 = vpop.f32.mrf.mxu0
      %v578 = vadd.f32 %v478, %v577
      %579 = vmatmul.f32.gmra.mxu0 %v423
      %v580 = vpop.f32.mrf.mxu0
      %v581 = vadd.f32 %v483, %v580
      %582 = vmatmul.f32.gmra.mxu0 %v425
      %v583 = vpop.f32.mrf.mxu0
      %v584 = vadd.f32 %v488, %v583
      %585 = vmatmul.f32.gmra.mxu0 %v427
      %v586 = vpop.f32.mrf.mxu0
      %v587 = vadd.f32 %v493, %v586
      %588 = vmatmul.f32.gmra.mxu0 %v429
      %v589 = vpop.f32.mrf.mxu0
      %v590 = vadd.f32 %v498, %v589
      %591 = vmatmul.f32.gmra.mxu0 %v431
      %v592 = vpop.f32.mrf.mxu0
      %v593 = vadd.f32 %v503, %v592
      %594 = vdwg.mxu0
      %595 = vmatpush.msra.mxu0 0.0
      %596 = vmatpush.msra.mxu0 0.0
      %597 = vmatpush.msra.mxu0 0.0
      %598 = vmatpush.msra.mxu0 0.0
      %599 = vmatpush.msra.mxu0 0.0
      %600 = vmatpush.msra.mxu0 %v405
      %601 = vmatpush.msra.mxu0 %v403
      %602 = vmatpush.msra.mxu0 %v401
      %603 = vmatpush.msra.mxu0 %v396
      %604 = vmatpush.msra.mxu0 %v394
      %605 = vmatpush.msra.mxu0 %v392
      %606 = vmatpush.msra.mxu0 %v387
      %607 = vmatpush.msra.mxu0 %v385
      %608 = vmatpush.msra.mxu0 %v383
      %609 = vmatpush.msra.mxu0 %v378
      %610 = vmatpush.msra.mxu0 %v376
      %611 = vmatmul.f32.gmra.mxu0 %v507
      %v612 = vpop.f32.mrf.mxu0
      %v613 = vadd.f32 %v560, %v612
      %614 = vmatmul.f32.gmra.mxu0 %v510
      %v615 = vpop.f32.mrf.mxu0
      %v616 = vadd.f32 %v563, %v615
      %617 = vmatmul.f32.gmra.mxu0 %v513
      %v618 = vpop.f32.mrf.mxu0
      %v619 = vadd.f32 %v566, %v618
      %620 = vmatmul.f32.gmra.mxu0 %v516
      %v621 = vpop.f32.mrf.mxu0
      %v622 = vadd.f32 %v569, %v621
      %623 = vmatmul.f32.gmra.mxu0 %v519
      %v624 = vpop.f32.mrf.mxu0
      %v625 = vadd.f32 %v572, %v624
      %626 = vmatmul.f32.gmra.mxu0 %v522
      %v627 = vpop.f32.mrf.mxu0
      %v628 = vadd.f32 %v575, %v627
      %629 = vmatmul.f32.gmra.mxu0 %v525
      %v630 = vpop.f32.mrf.mxu0
      %v631 = vadd.f32 %v578, %v630
      %632 = vmatmul.f32.gmra.mxu0 %v528
      %v633 = vpop.f32.mrf.mxu0
      %v634 = vadd.f32 %v581, %v633
      %635 = vmatmul.f32.gmra.mxu0 %v531
      %v636 = vpop.f32.mrf.mxu0
      %v637 = vadd.f32 %v584, %v636
      %638 = vmatmul.f32.gmra.mxu0 %v534
      %v639 = vpop.f32.mrf.mxu0
      %v640 = vadd.f32 %v587, %v639
      %641 = vmatmul.f32.gmra.mxu0 %v537
      %v642 = vpop.f32.mrf.mxu0
      %v643 = vadd.f32 %v590, %v642
      %644 = vmatmul.f32.gmra.mxu0 %v540
      %v645 = vpop.f32.mrf.mxu0
      %v646 = vadd.f32 %v593, %v645
      %647 = vdwg.mxu0
      %vm648 = vcmask 162816
      %649 = vst.msk [vmem:[%s251] sm:$0xff] %vm648, %v613
      %650 = vst.msk [vmem:[%s251 + $0x8] sm:$0xff] %vm648, %v616
      %651 = vst.msk [vmem:[%s251 + $0x10] sm:$0xff] %vm648, %v619
      %652 = vst.msk [vmem:[%s251 + $0x18] sm:$0xff] %vm648, %v622
      %653 = vst.msk [vmem:[%s251 + $0x20] sm:$0xff] %vm648, %v625
      %654 = vst.msk [vmem:[%s251 + $0x28] sm:$0xff] %vm648, %v628
      %655 = vst.msk [vmem:[%s251 + $0x30] sm:$0xff] %vm648, %v631
      %656 = vst.msk [vmem:[%s251 + $0x38] sm:$0xff] %vm648, %v634
      %657 = vst.msk [vmem:[%s251 + $0x40] sm:$0xff] %vm648, %v637
      %658 = vst.msk [vmem:[%s251 + $0x48] sm:$0xff] %vm648, %v640
      %659 = vst.msk [vmem:[%s251 + $0x50] sm:$0xff] %vm648, %v643
      %660 = vst.msk [vmem:[%s251 + $0x58] sm:$0xff] %vm648, %v646
      %p661 = scmp.lt.s32.totalorder %s17, 1
      %s662 = scalar_select %p661, %s17, 1
      %s663 = smul.addr %s662, 12
      %s664 = smul.addr %s663, 8
      %s665 = scalar_lea.vmem %s6, %s664
      // Predicated region
      $region45: #{tpu_custom_call.1} parent=43 // pred_check
        %p666 = pneg %p166
      $region46: #{tpu_custom_call.1} parent=43 // pred_check_branch
        %668 = sbr.rel (%p666) target = $region48
      $region47: #{tpu_custom_call.1} parent=43 // pred_region
        _
      $region48: #{tpu_custom_call.1} parent=43 // pred_fallthru
        _
    $region44: #{tpu_custom_call.1} parent=5 // pred_fallthru
      _
    %p669 = scmp.le.s32.totalorder 2, %s12
    // Predicated region
    $region49: #{tpu_custom_call.1} parent=5 // pred_check
      %p670 = pneg %p669
    $region50: #{tpu_custom_call.1} parent=5 // pred_check_branch
      %672 = sbr.rel (%p670) target = $region52
    $region51: #{tpu_custom_call.1} parent=5 // pred_region
      %s673 = ssub.s32 %s12, 2
      // Predicated region
      $region53: #{tpu_custom_call.1} parent=51 // pred_check
        %p674 = pneg %p172
      $region54: #{tpu_custom_call.1} parent=51 // pred_check_branch
        %676 = sbr.rel (%p674) target = $region56
      $region55: #{tpu_custom_call.1} parent=51 // pred_region
        %p677 = scmp.lt.s32.totalorder %s18, 1
        %s678 = scalar_select %p677, %s18, 1
        %s679 = smul.addr %s678, 12
        %s680 = smul.addr %s679, 8
        %s681 = scalar_lea.vmem %s6, %s680
      $region56: #{tpu_custom_call.1} parent=51 // pred_fallthru
        _
    $region52: #{tpu_custom_call.1} parent=5 // pred_fallthru
      _
  $region6: #{tpu_custom_call.1} parent=0 // loop_footer
    %s16 = sadd.s32 1, %s12
  $region7: #{tpu_custom_call.1} parent=0 // loop_footer_branch
    %11 = sbr.rel target = $region3
  $region8: #{tpu_custom_call.1} parent=0 // loop_exit
    _

</llo_original>
